<compile_context>
chip_gen: v7x
topology: tpu7x:2x2x1
jax: 0.10.0
libtpu: 0.0.40
codegen_flags: <defaults>
</compile_context>

<pallas_src>
import jax
import jax.numpy as jnp
from jax.experimental import pallas as pl
from jax.experimental.pallas import tpu as pltpu

KSIZE = 3
PAD = KSIZE // 2

# Classic median-of-9 compare-exchange network (rows sorted, then column max/med/min,
# then median of those three). After applying these exchanges, element 4 is the median.
_MEDIAN9_NET = (
    (1, 2), (4, 5), (7, 8),
    (0, 1), (3, 4), (6, 7),
    (1, 2), (4, 5), (7, 8),
    (0, 3), (5, 8), (4, 7),
    (3, 6), (1, 4), (2, 5),
    (4, 7), (4, 2), (6, 4),
    (4, 2),
)


def _median3_kernel(x_ref, o_ref):
    # x_ref / o_ref: (TP, H, W) block of planes in VMEM.
    x = x_ref[...].astype(jnp.float32)
    _, _, w = x.shape

    # Vertical neighbors (row i-1 / i+1) with replicate border: sublane-offset slices.
    up = jnp.concatenate([x[:, :1, :], x[:, :-1, :]], axis=1)     # x[max(i-1, 0)]
    down = jnp.concatenate([x[:, 1:, :], x[:, -1:, :]], axis=1)   # x[min(i+1, H-1)]

    # Horizontal neighbors (col j-1 / j+1) via XLU lane rotation + border fix.
    col = jax.lax.broadcasted_iota(jnp.int32, x.shape, 2)
    first_col = col == 0
    last_col = col == (w - 1)

    def shift_left(a):   # value from column j-1, replicate at j=0
        return jnp.where(first_col, a, pltpu.roll(a, shift=1, axis=2))

    def shift_right(a):  # value from column j+1, replicate at j=W-1
        return jnp.where(last_col, a, pltpu.roll(a, shift=w - 1, axis=2))

    v = [
        shift_left(up), up, shift_right(up),
        shift_left(x), x, shift_right(x),
        shift_left(down), down, shift_right(down),
    ]

    # Median-of-9 exchange network; dead min/max halves are removed by XLA DCE.
    for i, j in _MEDIAN9_NET:
        a, b = v[i], v[j]
        v[i] = jnp.minimum(a, b)
        v[j] = jnp.maximum(a, b)

    o_ref[...] = v[4].astype(o_ref.dtype)


def _choose_planes_per_block(n_planes, plane_f32_bytes, budget_bytes=1 << 20):
    """Fold as many planes per grid step as fit a small f32 budget; keep grid >= 2."""
    tp = max(1, min(n_planes, budget_bytes // max(plane_f32_bytes, 1)))
    while tp > 1 and n_planes % tp:
        tp -= 1
    if tp == n_planes and n_planes >= 2:
        tp = n_planes // 2
        while tp > 1 and n_planes % tp:
            tp -= 1
    return tp


def median_blur(noised_and_cover):
    """Pallas equivalent of MedianBlur.forward: returns [blurred, cover]."""
    noised_image, cover_image = noised_and_cover
    B, C, H, W = noised_image.shape
    N = B * C

    planes = noised_image.reshape(N, H, W)
    tp = _choose_planes_per_block(N, H * W * 4)
    grid = (N // tp,)

    blurred = pl.pallas_call(
        _median3_kernel,
        out_shape=jax.ShapeDtypeStruct((N, H, W), noised_image.dtype),
        grid=grid,
        in_specs=[pl.BlockSpec((tp, H, W), lambda i: (i, 0, 0))],
        out_specs=pl.BlockSpec((tp, H, W), lambda i: (i, 0, 0)),
        compiler_params=pltpu.CompilerParams(
            dimension_semantics=("parallel",),
            vmem_limit_bytes=32 * 1024 * 1024,
        ),
    )(planes)

    return [blurred.reshape(B, C, H, W), cover_image]


def _reference_median_blur(noised_image):
    """Plain-JAX reference (exact median of 3x3 replicate-padded neighborhood)."""
    B, C, H, W = noised_image.shape
    xp = jnp.pad(noised_image, ((0, 0), (0, 0), (PAD, PAD), (PAD, PAD)), mode="edge")
    windows = jnp.stack(
        [xp[:, :, di:di + H, dj:dj + W] for di in range(KSIZE) for dj in range(KSIZE)],
        axis=0,
    )
    return jnp.median(windows, axis=0).astype(noised_image.dtype)


if __name__ == "__main__":
    key = jax.random.PRNGKey(0)
    k1, k2 = jax.random.split(key)
    B, C, H, W = 2, 4, 16, 16
    noised = jax.random.normal(k1, (B, C, H, W), dtype=jnp.float32)
    cover = jax.random.normal(k2, (B, C, H, W), dtype=jnp.float32)

    out = median_blur([noised, cover])
    blurred = jax.block_until_ready(out[0])
    cover_out = jax.block_until_ready(out[1])

    ref = _reference_median_blur(noised)
    assert blurred.shape == (B, C, H, W)
    assert cover_out.shape == (B, C, H, W)
    assert jnp.allclose(blurred, ref, atol=1e-6), "median blur mismatch vs reference"
    assert jnp.array_equal(cover_out, cover), "cover image must pass through unchanged"

    print("KERNEL_OK")
</pallas_src>

<mosaic_0001>
module attributes {stable_mosaic.version = 11 : i64} {
  func.func @_median3_kernel(%arg0: i32, %arg1: memref<4x16x16xf32, #tpu.memory_space<vmem>>, %arg2: memref<4x16x16xf32, #tpu.memory_space<vmem>>) attributes {dimension_semantics = [#tpu.dimension_semantics<parallel>], iteration_bounds = array<i64: 2>, scalar_prefetch = 0 : i64, scratch_operands = 0 : i64, tpu.core_type = #tpu.core_type<tc>, window_params = [{transform_indices = @transform_0, window_bounds = array<i64: 4, 16, 16>}, {transform_indices = @transform_1, window_bounds = array<i64: 4, 16, 16>}]} {
    %c0 = arith.constant 0 : index
    %c0_0 = arith.constant 0 : index
    %c0_1 = arith.constant 0 : index
    %0 = vector.load %arg1[%c0, %c0_0, %c0_1] : memref<4x16x16xf32, #tpu.memory_space<vmem>>, vector<4x16x16xf32>
    %1 = vector.extract_strided_slice %0 {offsets = [0, 0, 0], sizes = [4, 1, 16], strides = [1, 1, 1]} : vector<4x16x16xf32> to vector<4x1x16xf32>
    %2 = vector.extract_strided_slice %0 {offsets = [0, 0, 0], sizes = [4, 15, 16], strides = [1, 1, 1]} : vector<4x16x16xf32> to vector<4x15x16xf32>
    %3 = tpu.concatenate %1, %2 in 1 : vector<4x1x16xf32>, vector<4x15x16xf32> -> vector<4x16x16xf32>
    %4 = vector.extract_strided_slice %0 {offsets = [0, 1, 0], sizes = [4, 15, 16], strides = [1, 1, 1]} : vector<4x16x16xf32> to vector<4x15x16xf32>
    %5 = vector.extract_strided_slice %0 {offsets = [0, 15, 0], sizes = [4, 1, 16], strides = [1, 1, 1]} : vector<4x16x16xf32> to vector<4x1x16xf32>
    %6 = tpu.concatenate %4, %5 in 1 : vector<4x15x16xf32>, vector<4x1x16xf32> -> vector<4x16x16xf32>
    %7 = tpu.iota {dimensions = array<i32: 2>} : vector<4x16x16xi32>
    %c0_i32 = arith.constant 0 : i32
    %8 = vector.broadcast %c0_i32 : i32 to vector<4x16x16xi32>
    %9 = arith.cmpi eq, %7, %8 : vector<4x16x16xi32>
    %c15_i32 = arith.constant 15 : i32
    %10 = vector.broadcast %c15_i32 : i32 to vector<4x16x16xi32>
    %11 = arith.cmpi eq, %7, %10 : vector<4x16x16xi32>
    %c1_i32 = arith.constant 1 : i32
    %12 = tpu.dynamic_rotate %3 by %c1_i32 dim 2 : vector<4x16x16xf32>, i32 -> vector<4x16x16xf32>
    %13 = arith.select %9, %3, %12 : vector<4x16x16xi1>, vector<4x16x16xf32>
    %c15_i32_2 = arith.constant 15 : i32
    %14 = tpu.dynamic_rotate %3 by %c15_i32_2 dim 2 : vector<4x16x16xf32>, i32 -> vector<4x16x16xf32>
    %15 = arith.select %11, %3, %14 : vector<4x16x16xi1>, vector<4x16x16xf32>
    %c1_i32_3 = arith.constant 1 : i32
    %16 = tpu.dynamic_rotate %0 by %c1_i32_3 dim 2 : vector<4x16x16xf32>, i32 -> vector<4x16x16xf32>
    %17 = arith.select %9, %0, %16 : vector<4x16x16xi1>, vector<4x16x16xf32>
    %c15_i32_4 = arith.constant 15 : i32
    %18 = tpu.dynamic_rotate %0 by %c15_i32_4 dim 2 : vector<4x16x16xf32>, i32 -> vector<4x16x16xf32>
    %19 = arith.select %11, %0, %18 : vector<4x16x16xi1>, vector<4x16x16xf32>
    %c1_i32_5 = arith.constant 1 : i32
    %20 = tpu.dynamic_rotate %6 by %c1_i32_5 dim 2 : vector<4x16x16xf32>, i32 -> vector<4x16x16xf32>
    %21 = arith.select %9, %6, %20 : vector<4x16x16xi1>, vector<4x16x16xf32>
    %c15_i32_6 = arith.constant 15 : i32
    %22 = tpu.dynamic_rotate %6 by %c15_i32_6 dim 2 : vector<4x16x16xf32>, i32 -> vector<4x16x16xf32>
    %23 = arith.select %11, %6, %22 : vector<4x16x16xi1>, vector<4x16x16xf32>
    %24 = arith.minimumf %3, %15 : vector<4x16x16xf32>
    %25 = arith.maximumf %3, %15 : vector<4x16x16xf32>
    %26 = arith.minimumf %0, %19 : vector<4x16x16xf32>
    %27 = arith.maximumf %0, %19 : vector<4x16x16xf32>
    %28 = arith.minimumf %6, %23 : vector<4x16x16xf32>
    %29 = arith.maximumf %6, %23 : vector<4x16x16xf32>
    %30 = arith.minimumf %13, %24 : vector<4x16x16xf32>
    %31 = arith.maximumf %13, %24 : vector<4x16x16xf32>
    %32 = arith.minimumf %17, %26 : vector<4x16x16xf32>
    %33 = arith.maximumf %17, %26 : vector<4x16x16xf32>
    %34 = arith.minimumf %21, %28 : vector<4x16x16xf32>
    %35 = arith.maximumf %21, %28 : vector<4x16x16xf32>
    %36 = arith.minimumf %31, %25 : vector<4x16x16xf32>
    %37 = arith.maximumf %31, %25 : vector<4x16x16xf32>
    %38 = arith.minimumf %33, %27 : vector<4x16x16xf32>
    %39 = arith.maximumf %33, %27 : vector<4x16x16xf32>
    %40 = arith.minimumf %35, %29 : vector<4x16x16xf32>
    %41 = arith.maximumf %35, %29 : vector<4x16x16xf32>
    %42 = arith.maximumf %30, %32 : vector<4x16x16xf32>
    %43 = arith.minimumf %39, %41 : vector<4x16x16xf32>
    %44 = arith.minimumf %38, %40 : vector<4x16x16xf32>
    %45 = arith.maximumf %38, %40 : vector<4x16x16xf32>
    %46 = arith.maximumf %42, %34 : vector<4x16x16xf32>
    %47 = arith.maximumf %36, %44 : vector<4x16x16xf32>
    %48 = arith.minimumf %37, %43 : vector<4x16x16xf32>
    %49 = arith.minimumf %47, %45 : vector<4x16x16xf32>
    %50 = arith.minimumf %49, %48 : vector<4x16x16xf32>
    %51 = arith.maximumf %49, %48 : vector<4x16x16xf32>
    %52 = arith.maximumf %46, %50 : vector<4x16x16xf32>
    %53 = arith.minimumf %52, %51 : vector<4x16x16xf32>
    %c0_7 = arith.constant 0 : index
    %c0_8 = arith.constant 0 : index
    %c0_9 = arith.constant 0 : index
    %54 = vector.load %arg2[%c0_7, %c0_8, %c0_9] : memref<4x16x16xf32, #tpu.memory_space<vmem>>, vector<4x16x16xf32>
    tpu.vector_store %arg2[%c0_7, %c0_8, %c0_9], %53 {strides = array<i32>} : memref<4x16x16xf32, #tpu.memory_space<vmem>>, vector<4x16x16xf32>,
    return
  }
  func.func @transform_0(%arg0: i32) -> (i32, i32, i32) {
    %c0_i32 = arith.constant 0 : i32
    %c0_i32_0 = arith.constant 0 : i32
    %c0_i32_1 = arith.constant 0 : i32
    return %arg0, %c0_i32, %c0_i32_0 : i32, i32, i32
  }
  func.func @transform_1(%arg0: i32) -> (i32, i32, i32) {
    %c0_i32 = arith.constant 0 : i32
    %c0_i32_0 = arith.constant 0 : i32
    %c0_i32_1 = arith.constant 0 : i32
    return %arg0, %c0_i32, %c0_i32_0 : i32, i32, i32
  }
}

</mosaic_0001>

<llo_original>
// kernel: tpu_custom_call.1
$region0: #{tpu_custom_call.1}
  #allocation0 [shape = 'u32[]', space=smem, size = 0x4, offset = 0x4, fixed_abs, tag = 'smem constant byte address 0x4 - core index']
  #allocation1 [shape = 'u32[144,128]{1,0:T(1,128)}', space=vmem, size = 0x12000, scoped, tag = 'internal scratch']
  %s0 = inlined_call_operand.hbm [shape: f32[8,16,16], index: 0, kind: input, shape index: {}]
  %s1 = inlined_call_operand.hbm [shape: f32[8,16,16], index: 1, kind: output, shape index: {}]
  %s2 = sld [smem:[#allocation0]]
  $region41: #{tpu_custom_call.1} parent=0
    _
  %s4 = ssub.s32 1, %s2
  %s5 = scalar_select 0, %s4, %s2
  $region1: #{tpu_custom_call.1} parent=0
    #allocation2 [shape = 'u8[65536]{0}', space=vmem, size = 0x10000, scoped, tag = 'input window, operand 0']
    #allocation3 [shape = 's32[2]{0}', space=sflag, size = 0x8, scoped, tag = 'scoped memory for tpu_custom_call.1']
    #allocation4 [shape = 's32[2]{0}', space=sflag, size = 0x8, scoped, tag = 'scoped memory for tpu_custom_call.1']
    #allocation5 [shape = 'u8[65536]{0}', space=vmem, size = 0x10000, scoped, tag = 'output window, operand 0']
    %6 = vsyncpa [#allocation3], 0
    %s7 = scalar_lea.sflag [#allocation3], 1
    %8 = vsyncpa %s7, 0
    %9 = vsyncpa [#allocation4], 0
    %s10 = scalar_lea.sflag [#allocation4], 1
    %11 = vsyncpa %s10, 0
    loop: start=0, step=1, limit=4
    $region2: #{tpu_custom_call.1} parent=1 // loop_pre_header
      _
    $region3: #{tpu_custom_call.1} parent=1 // loop_header
      %s13 = sphi 0, %s17
      %p14 = scmp.ge.s32.totalorder %s13, 4
      %s23 = sphi 0, %s25
      %s26 = sphi 0, %s23
      %s27 = sphi 0, %s26
      %s43 = sphi 0, %s27
      %s49 = sphi 0, %s51
      %s52 = sphi 0, %s49
      %s53 = sphi 0, %s52
      %s69 = sphi 0, %s53
    $region4: #{tpu_custom_call.1} parent=1 // loop_header_branch
      %16 = sbr.rel (%p14) target = $region8
    $region5: #{tpu_custom_call.1} parent=1 // loop_body
      %s18 = ssub.s32 %s13, 1
      %s19 = ssub.s32 %s13, 2
      %s20 = sadd.s32 %s13, 1
      %s21 = ssub.s32 %s13, %s20
      %p22 = scmp.eq.s32.totalorder %s21, 0
      %s24 = sadd.s32 %s23, 1
      %s25 = scalar_select %p22, %s23, %s24
      %p28 = pneg %p22
      %p29 = scmp.eq.s32.totalorder %s13, 1
      %p30 = por %p28, %p29
      %p31 = scmp.ne.s32.totalorder %s23, %s26
      %p32 = scmp.eq.s32.totalorder %s13, 0
      %p33 = por %p31, %p32
      %p34 = scmp.ne.s32.totalorder %s23, %s26
      %p35 = scmp.eq.s32.totalorder %s18, 1
      %p36 = por %p34, %p35
      %p37 = scmp.ne.s32.totalorder %s26, %s27
      %p38 = scmp.eq.s32.totalorder %s18, 0
      %p39 = por %p37, %p38
      %p40 = scmp.ne.s32.totalorder %s26, %s27
      %p41 = scmp.eq.s32.totalorder %s19, 1
      %p42 = por %p40, %p41
      %p44 = scmp.ne.s32.totalorder %s27, %s43
      %p45 = scmp.eq.s32.totalorder %s19, 0
      %p46 = por %p44, %p45
      %s47 = ssub.s32 %s13, %s20
      %p48 = scmp.eq.s32.totalorder %s47, 0
      %s50 = sadd.s32 %s49, 1
      %s51 = scalar_select %p48, %s49, %s50
      %p54 = pneg %p48
      %p55 = scmp.eq.s32.totalorder %s13, 1
      %p56 = por %p54, %p55
      %p57 = scmp.ne.s32.totalorder %s49, %s52
      %p58 = scmp.eq.s32.totalorder %s13, 0
      %p59 = por %p57, %p58
      %p60 = scmp.ne.s32.totalorder %s49, %s52
      %p61 = scmp.eq.s32.totalorder %s18, 1
      %p62 = por %p60, %p61
      %p63 = scmp.ne.s32.totalorder %s52, %s53
      %p64 = scmp.eq.s32.totalorder %s18, 0
      %p65 = por %p63, %p64
      %p66 = scmp.ne.s32.totalorder %s52, %s53
      %p67 = scmp.eq.s32.totalorder %s19, 1
      %p68 = por %p66, %p67
      %p70 = scmp.ne.s32.totalorder %s53, %s69
      %p71 = scmp.eq.s32.totalorder %s19, 0
      %p72 = por %p70, %p71
      %p73 = scmp.le.s32.totalorder 1, %s13
      %p74 = scmp.lt.s32.totalorder %s13, 3
      %p75 = pnand %p73, %p74
      %p76 = pneg %p75
      // Predicated region
      $region9: #{tpu_custom_call.1} parent=5 // pred_check
        _
      $region10: #{tpu_custom_call.1} parent=5 // pred_check_branch
        %78 = sbr.rel (%p75) target = $region12
      $region11: #{tpu_custom_call.1} parent=5 // pred_region
        %s79 = ssub.s32 %s13, 1
      $region12: #{tpu_custom_call.1} parent=5 // pred_fallthru
        _
      %p80 = scmp.lt.s32.totalorder %s13, 2
      // Predicated region
      $region13: #{tpu_custom_call.1} parent=5 // pred_check
        %p81 = pneg %p80
      $region14: #{tpu_custom_call.1} parent=5 // pred_check_branch
        %83 = sbr.rel (%p81) target = $region16
      $region15: #{tpu_custom_call.1} parent=5 // pred_region
        // Predicated region
        $region17: #{tpu_custom_call.1} parent=15 // pred_check
          %p84 = pneg %p33
        $region18: #{tpu_custom_call.1} parent=15 // pred_check_branch
          %86 = sbr.rel (%p84) target = $region20
        $region19: #{tpu_custom_call.1} parent=15 // pred_region
          %s87 = sand.u32 %s23, 1
          %s88 = scalar_lea.sflag [#allocation3], %s87
          %s89 = sand.u32 %s23, 1
          %s90 = smul.addr %s89, 64
          %s91 = scalar_lea.vmem [#allocation2], %s90
          %s92 = smul.u32 4, %s13
          %s94 = ssub.s32 1024, 1024
          %95 = vsyncadd %s88, %s94
          %s96 = smul.addr %s92, 2
          %s97 = smul.addr %s96, 128
          %s98 = scalar_lea.hbm %s0, %s97
          %s99 = sshll.u32 %s91, 4
          %s100 = int_to_ptr.vmem [resolvable:$true] %s99
          %105 = dma.hbm_to_vmem [thread:$0]  %s98, 1024, %s100, %s88, 128, 128, 8
        $region20: #{tpu_custom_call.1} parent=15 // pred_fallthru
          _
      $region16: #{tpu_custom_call.1} parent=5 // pred_fallthru
        _
      %p106 = scmp.le.s32.totalorder 1, %s13
      %p107 = scmp.lt.s32.totalorder %s13, 3
      %p108 = pnand %p106, %p107
      %p109 = pneg %p108
      // Predicated region
      $region21: #{tpu_custom_call.1} parent=5 // pred_check
        _
      $region22: #{tpu_custom_call.1} parent=5 // pred_check_branch
        %111 = sbr.rel (%p108) target = $region24
      $region23: #{tpu_custom_call.1} parent=5 // pred_region
        %s112 = ssub.s32 %s13, 1
        %s113 = sand.u32 %s26, 1
        %s114 = scalar_lea.sflag [#allocation3], %s113
        %s115 = sand.u32 %s26, 1
        %s116 = smul.addr %s115, 64
        %s117 = scalar_lea.vmem [#allocation2], %s116
        // Predicated region
        $region25: #{tpu_custom_call.1} parent=23 // pred_check
          %p118 = pneg %p39
        $region26: #{tpu_custom_call.1} parent=23 // pred_check_branch
          %120 = sbr.rel (%p118) target = $region28
        $region27: #{tpu_custom_call.1} parent=23 // pred_region
          %121 = dma.done %s114, 1024
        $region28: #{tpu_custom_call.1} parent=23 // pred_fallthru
          _
        %s122 = sand.u32 %s26, 1
        %s123 = scalar_lea.sflag [#allocation3], %s122
        %s124 = sand.u32 %s26, 1
        %s125 = smul.addr %s124, 64
        %s126 = scalar_lea.vmem [#allocation2], %s125
        %p127 = pneg %p39
        %p128 = pneg %p36
        %p129 = pneg %p65
        %p130 = pneg %p62
        %s131 = sand.u32 %s52, 1
        %s132 = scalar_lea.sflag [#allocation4], %s131
        %s133 = sand.u32 %s52, 1
        %s134 = smul.addr %s133, 64
        %s135 = scalar_lea.vmem [#allocation5], %s134
        %s136 = smul.u32 4, %s18
        %s137 = smul.u32 4, %s18
        %v138 = vld [vmem:[%s117] sm:$0xff]
        %v139 = vld [vmem:[%s117 + $0x8] sm:$0xff]
        %v140 = vld [vmem:[%s117 + $0x10] sm:$0xff]
        %v141 = vld [vmem:[%s117 + $0x18] sm:$0xff]
        %v142 = vld [vmem:[%s117 + $0x20] sm:$0xff]
        %v143 = vld [vmem:[%s117 + $0x28] sm:$0xff]
        %v144 = vld [vmem:[%s117 + $0x30] sm:$0xff]
        %v145 = vld [vmem:[%s117 + $0x38] sm:$0xff]
        %vm154 = vcmask 1040384
        %v155 = vrot.slane %v138, 7
        %v156 = vrot.slane %v139, 7
        %v157 = vsel %vm154, %v155, %v156
        %v158 = vrot.slane %v140, 7
        %v159 = vrot.slane %v141, 7
        %v160 = vsel %vm154, %v158, %v159
        %v161 = vrot.slane %v142, 7
        %v162 = vrot.slane %v143, 7
        %v163 = vsel %vm154, %v161, %v162
        %v164 = vrot.slane %v144, 7
        %v165 = vrot.slane %v145, 7
        %v166 = vsel %vm154, %v164, %v165
        %v175 = vsel %vm154, %v138, %v155
        %v176 = vsel %vm154, %v140, %v158
        %v177 = vsel %vm154, %v142, %v161
        %v178 = vsel %vm154, %v144, %v164
        %vm179 = vcmask 1046528
        %v180 = vrot.slane %v138, 1
        %v181 = vrot.slane %v139, 1
        %v182 = vsel %vm179, %v180, %v181
        %v183 = vrot.slane %v140, 1
        %v184 = vrot.slane %v141, 1
        %v185 = vsel %vm179, %v183, %v184
        %v186 = vrot.slane %v142, 1
        %v187 = vrot.slane %v143, 1
        %v188 = vsel %vm179, %v186, %v187
        %v189 = vrot.slane %v144, 1
        %v190 = vrot.slane %v145, 1
        %v191 = vsel %vm179, %v189, %v190
        %v200 = vsel %vm179, %v181, %v139
        %v201 = vsel %vm179, %v184, %v141
        %v202 = vsel %vm179, %v187, %v143
        %v203 = vsel %vm179, %v190, %v145
        %v204 = vlaneseq
        %v205 = vand.u32 %v204, 127
        %vm206 = vcmp.eq.s32.totalorder %v205, 0
        %vm207 = vcmp.eq.s32.totalorder %v205, 15
        %vm208 = vcmask 1047680
        %209 = vrot.lane.b32.xlu0 %v175, 16
        %v210 = vpop.permute.xlu0 %209
        %v211 = vsel %vm208, %v210, %v175
        %212 = vrot.lane.b32.xlu0 %v157, 16
        %v213 = vpop.permute.xlu0 %212
        %v214 = vsel %vm208, %v213, %v157
        %215 = vrot.lane.b32.xlu0 %v176, 16
        %v216 = vpop.permute.xlu0 %215
        %v217 = vsel %vm208, %v216, %v176
        %218 = vrot.lane.b32.xlu0 %v160, 16
        %v219 = vpop.permute.xlu0 %218
        %v220 = vsel %vm208, %v219, %v160
        %221 = vrot.lane.b32.xlu0 %v177, 16
        %v222 = vpop.permute.xlu0 %221
        %v223 = vsel %vm208, %v222, %v177
        %224 = vrot.lane.b32.xlu0 %v163, 16
        %v225 = vpop.permute.xlu0 %224
        %v226 = vsel %vm208, %v225, %v163
        %227 = vrot.lane.b32.xlu0 %v178, 16
        %v228 = vpop.permute.xlu0 %227
        %v229 = vsel %vm208, %v228, %v178
        %230 = vrot.lane.b32.xlu0 %v166, 16
        %v231 = vpop.permute.xlu0 %230
        %v232 = vsel %vm208, %v231, %v166
        %233 = vrot.lane.b32.xlu0 %v211, 16
        %v234 = vpop.permute.xlu0 %233
        %235 = vrot.lane.b32.xlu0 %v214, 16
        %v236 = vpop.permute.xlu0 %235
        %237 = vrot.lane.b32.xlu0 %v217, 16
        %v238 = vpop.permute.xlu0 %237
        %239 = vrot.lane.b32.xlu0 %v220, 16
        %v240 = vpop.permute.xlu0 %239
        %241 = vrot.lane.b32.xlu0 %v223, 16
        %v242 = vpop.permute.xlu0 %241
        %243 = vrot.lane.b32.xlu0 %v226, 16
        %v244 = vpop.permute.xlu0 %243
        %245 = vrot.lane.b32.xlu0 %v229, 16
        %v246 = vpop.permute.xlu0 %245
        %247 = vrot.lane.b32.xlu0 %v232, 16
        %v248 = vpop.permute.xlu0 %247
        %v249 = vsel %vm208, %v234, %v175
        %v250 = vsel %vm208, %v236, %v157
        %v251 = vsel %vm208, %v238, %v176
        %v252 = vsel %vm208, %v240, %v160
        %v253 = vsel %vm208, %v242, %v177
        %v254 = vsel %vm208, %v244, %v163
        %v255 = vsel %vm208, %v246, %v178
        %v256 = vsel %vm208, %v248, %v166
        %265 = vrot.lane.b32.xlu0 %v249, 113
        %v266 = vpop.permute.xlu0 %265
        %267 = vrot.lane.b32.xlu0 %v250, 113
        %v268 = vpop.permute.xlu0 %267
        %269 = vrot.lane.b32.xlu0 %v251, 113
        %v270 = vpop.permute.xlu0 %269
        %271 = vrot.lane.b32.xlu0 %v252, 113
        %v272 = vpop.permute.xlu0 %271
        %273 = vrot.lane.b32.xlu0 %v253, 113
        %v274 = vpop.permute.xlu0 %273
        %275 = vrot.lane.b32.xlu0 %v254, 113
        %v276 = vpop.permute.xlu0 %275
        %277 = vrot.lane.b32.xlu0 %v255, 113
        %v278 = vpop.permute.xlu0 %277
        %279 = vrot.lane.b32.xlu0 %v256, 113
        %v280 = vpop.permute.xlu0 %279
        %v289 = vsel %vm206, %v175, %v266
        %v290 = vsel %vm206, %v157, %v268
        %v291 = vsel %vm206, %v176, %v270
        %v292 = vsel %vm206, %v160, %v272
        %v293 = vsel %vm206, %v177, %v274
        %v294 = vsel %vm206, %v163, %v276
        %v295 = vsel %vm206, %v178, %v278
        %v296 = vsel %vm206, %v166, %v280
        %297 = vrot.lane.b32.xlu0 %v249, 127
        %v298 = vpop.permute.xlu0 %297
        %299 = vrot.lane.b32.xlu0 %v250, 127
        %v300 = vpop.permute.xlu0 %299
        %301 = vrot.lane.b32.xlu0 %v251, 127
        %v302 = vpop.permute.xlu0 %301
        %303 = vrot.lane.b32.xlu0 %v252, 127
        %v304 = vpop.permute.xlu0 %303
        %305 = vrot.lane.b32.xlu0 %v253, 127
        %v306 = vpop.permute.xlu0 %305
        %307 = vrot.lane.b32.xlu0 %v254, 127
        %v308 = vpop.permute.xlu0 %307
        %309 = vrot.lane.b32.xlu0 %v255, 127
        %v310 = vpop.permute.xlu0 %309
        %311 = vrot.lane.b32.xlu0 %v256, 127
        %v312 = vpop.permute.xlu0 %311
        %v321 = vsel %vm207, %v175, %v298
        %v322 = vsel %vm207, %v157, %v300
        %v323 = vsel %vm207, %v176, %v302
        %v324 = vsel %vm207, %v160, %v304
        %v325 = vsel %vm207, %v177, %v306
        %v326 = vsel %vm207, %v163, %v308
        %v327 = vsel %vm207, %v178, %v310
        %v328 = vsel %vm207, %v166, %v312
        %329 = vrot.lane.b32.xlu0 %v138, 16
        %v330 = vpop.permute.xlu0 %329
        %v331 = vsel %vm208, %v330, %v138
        %332 = vrot.lane.b32.xlu0 %v139, 16
        %v333 = vpop.permute.xlu0 %332
        %v334 = vsel %vm208, %v333, %v139
        %335 = vrot.lane.b32.xlu0 %v140, 16
        %v336 = vpop.permute.xlu0 %335
        %v337 = vsel %vm208, %v336, %v140
        %338 = vrot.lane.b32.xlu0 %v141, 16
        %v339 = vpop.permute.xlu0 %338
        %v340 = vsel %vm208, %v339, %v141
        %341 = vrot.lane.b32.xlu0 %v142, 16
        %v342 = vpop.permute.xlu0 %341
        %v343 = vsel %vm208, %v342, %v142
        %344 = vrot.lane.b32.xlu0 %v143, 16
        %v345 = vpop.permute.xlu0 %344
        %v346 = vsel %vm208, %v345, %v143
        %347 = vrot.lane.b32.xlu0 %v144, 16
        %v348 = vpop.permute.xlu0 %347
        %v349 = vsel %vm208, %v348, %v144
        %350 = vrot.lane.b32.xlu0 %v145, 16
        %v351 = vpop.permute.xlu0 %350
        %v352 = vsel %vm208, %v351, %v145
        %353 = vrot.lane.b32.xlu0 %v331, 16
        %v354 = vpop.permute.xlu0 %353
        %355 = vrot.lane.b32.xlu0 %v334, 16
        %v356 = vpop.permute.xlu0 %355
        %357 = vrot.lane.b32.xlu0 %v337, 16
        %v358 = vpop.permute.xlu0 %357
        %359 = vrot.lane.b32.xlu0 %v340, 16
        %v360 = vpop.permute.xlu0 %359
        %361 = vrot.lane.b32.xlu0 %v343, 16
        %v362 = vpop.permute.xlu0 %361
        %363 = vrot.lane.b32.xlu0 %v346, 16
        %v364 = vpop.permute.xlu0 %363
        %365 = vrot.lane.b32.xlu0 %v349, 16
        %v366 = vpop.permute.xlu0 %365
        %367 = vrot.lane.b32.xlu0 %v352, 16
        %v368 = vpop.permute.xlu0 %367
        %v369 = vsel %vm208, %v354, %v138
        %v370 = vsel %vm208, %v356, %v139
        %v371 = vsel %vm208, %v358, %v140
        %v372 = vsel %vm208, %v360, %v141
        %v373 = vsel %vm208, %v362, %v142
        %v374 = vsel %vm208, %v364, %v143
        %v375 = vsel %vm208, %v366, %v144
        %v376 = vsel %vm208, %v368, %v145
        %385 = vrot.lane.b32.xlu0 %v369, 113
        %v386 = vpop.permute.xlu0 %385
        %387 = vrot.lane.b32.xlu0 %v370, 113
        %v388 = vpop.permute.xlu0 %387
        %389 = vrot.lane.b32.xlu0 %v371, 113
        %v390 = vpop.permute.xlu0 %389
        %391 = vrot.lane.b32.xlu0 %v372, 113
        %v392 = vpop.permute.xlu0 %391
        %393 = vrot.lane.b32.xlu0 %v373, 113
        %v394 = vpop.permute.xlu0 %393
        %395 = vrot.lane.b32.xlu0 %v374, 113
        %v396 = vpop.permute.xlu0 %395
        %397 = vrot.lane.b32.xlu0 %v375, 113
        %v398 = vpop.permute.xlu0 %397
        %399 = vrot.lane.b32.xlu0 %v376, 113
        %v400 = vpop.permute.xlu0 %399
        %v409 = vsel %vm206, %v138, %v386
        %v410 = vsel %vm206, %v139, %v388
        %v411 = vsel %vm206, %v140, %v390
        %v412 = vsel %vm206, %v141, %v392
        %v413 = vsel %vm206, %v142, %v394
        %v414 = vsel %vm206, %v143, %v396
        %v415 = vsel %vm206, %v144, %v398
        %v416 = vsel %vm206, %v145, %v400
        %417 = vrot.lane.b32.xlu0 %v369, 127
        %v418 = vpop.permute.xlu0 %417
        %419 = vrot.lane.b32.xlu0 %v370, 127
        %v420 = vpop.permute.xlu0 %419
        %421 = vrot.lane.b32.xlu0 %v371, 127
        %v422 = vpop.permute.xlu0 %421
        %423 = vrot.lane.b32.xlu0 %v372, 127
        %v424 = vpop.permute.xlu0 %423
        %425 = vrot.lane.b32.xlu0 %v373, 127
        %v426 = vpop.permute.xlu0 %425
        %427 = vrot.lane.b32.xlu0 %v374, 127
        %v428 = vpop.permute.xlu0 %427
        %429 = vrot.lane.b32.xlu0 %v375, 127
        %v430 = vpop.permute.xlu0 %429
        %431 = vrot.lane.b32.xlu0 %v376, 127
        %v432 = vpop.permute.xlu0 %431
        %v441 = vsel %vm207, %v138, %v418
        %v442 = vsel %vm207, %v139, %v420
        %v443 = vsel %vm207, %v140, %v422
        %v444 = vsel %vm207, %v141, %v424
        %v445 = vsel %vm207, %v142, %v426
        %v446 = vsel %vm207, %v143, %v428
        %v447 = vsel %vm207, %v144, %v430
        %v448 = vsel %vm207, %v145, %v432
        %449 = vrot.lane.b32.xlu0 %v182, 16
        %v450 = vpop.permute.xlu0 %449
        %v451 = vsel %vm208, %v450, %v182
        %452 = vrot.lane.b32.xlu0 %v200, 16
        %v453 = vpop.permute.xlu0 %452
        %v454 = vsel %vm208, %v453, %v200
        %455 = vrot.lane.b32.xlu0 %v185, 16
        %v456 = vpop.permute.xlu0 %455
        %v457 = vsel %vm208, %v456, %v185
        %458 = vrot.lane.b32.xlu0 %v201, 16
        %v459 = vpop.permute.xlu0 %458
        %v460 = vsel %vm208, %v459, %v201
        %461 = vrot.lane.b32.xlu0 %v188, 16
        %v462 = vpop.permute.xlu0 %461
        %v463 = vsel %vm208, %v462, %v188
        %464 = vrot.lane.b32.xlu0 %v202, 16
        %v465 = vpop.permute.xlu0 %464
        %v466 = vsel %vm208, %v465, %v202
        %467 = vrot.lane.b32.xlu0 %v191, 16
        %v468 = vpop.permute.xlu0 %467
        %v469 = vsel %vm208, %v468, %v191
        %470 = vrot.lane.b32.xlu0 %v203, 16
        %v471 = vpop.permute.xlu0 %470
        %v472 = vsel %vm208, %v471, %v203
        %473 = vrot.lane.b32.xlu0 %v451, 16
        %v474 = vpop.permute.xlu0 %473
        %475 = vrot.lane.b32.xlu0 %v454, 16
        %v476 = vpop.permute.xlu0 %475
        %477 = vrot.lane.b32.xlu0 %v457, 16
        %v478 = vpop.permute.xlu0 %477
        %479 = vrot.lane.b32.xlu0 %v460, 16
        %v480 = vpop.permute.xlu0 %479
        %481 = vrot.lane.b32.xlu0 %v463, 16
        %v482 = vpop.permute.xlu0 %481
        %483 = vrot.lane.b32.xlu0 %v466, 16
        %v484 = vpop.permute.xlu0 %483
        %485 = vrot.lane.b32.xlu0 %v469, 16
        %v486 = vpop.permute.xlu0 %485
        %487 = vrot.lane.b32.xlu0 %v472, 16
        %v488 = vpop.permute.xlu0 %487
        %v489 = vsel %vm208, %v474, %v182
        %v490 = vsel %vm208, %v476, %v200
        %v491 = vsel %vm208, %v478, %v185
        %v492 = vsel %vm208, %v480, %v201
        %v493 = vsel %vm208, %v482, %v188
        %v494 = vsel %vm208, %v484, %v202
        %v495 = vsel %vm208, %v486, %v191
        %v496 = vsel %vm208, %v488, %v203
        %505 = vrot.lane.b32.xlu0 %v489, 113
        %v506 = vpop.permute.xlu0 %505
        %507 = vrot.lane.b32.xlu0 %v490, 113
        %v508 = vpop.permute.xlu0 %507
        %509 = vrot.lane.b32.xlu0 %v491, 113
        %v510 = vpop.permute.xlu0 %509
        %511 = vrot.lane.b32.xlu0 %v492, 113
        %v512 = vpop.permute.xlu0 %511
        %513 = vrot.lane.b32.xlu0 %v493, 113
        %v514 = vpop.permute.xlu0 %513
        %515 = vrot.lane.b32.xlu0 %v494, 113
        %v516 = vpop.permute.xlu0 %515
        %517 = vrot.lane.b32.xlu0 %v495, 113
        %v518 = vpop.permute.xlu0 %517
        %519 = vrot.lane.b32.xlu0 %v496, 113
        %v520 = vpop.permute.xlu0 %519
        %v529 = vsel %vm206, %v182, %v506
        %v530 = vsel %vm206, %v200, %v508
        %v531 = vsel %vm206, %v185, %v510
        %v532 = vsel %vm206, %v201, %v512
        %v533 = vsel %vm206, %v188, %v514
        %v534 = vsel %vm206, %v202, %v516
        %v535 = vsel %vm206, %v191, %v518
        %v536 = vsel %vm206, %v203, %v520
        %537 = vrot.lane.b32.xlu0 %v489, 127
        %v538 = vpop.permute.xlu0 %537
        %539 = vrot.lane.b32.xlu0 %v490, 127
        %v540 = vpop.permute.xlu0 %539
        %541 = vrot.lane.b32.xlu0 %v491, 127
        %v542 = vpop.permute.xlu0 %541
        %543 = vrot.lane.b32.xlu0 %v492, 127
        %v544 = vpop.permute.xlu0 %543
        %545 = vrot.lane.b32.xlu0 %v493, 127
        %v546 = vpop.permute.xlu0 %545
        %547 = vrot.lane.b32.xlu0 %v494, 127
        %v548 = vpop.permute.xlu0 %547
        %549 = vrot.lane.b32.xlu0 %v495, 127
        %v550 = vpop.permute.xlu0 %549
        %551 = vrot.lane.b32.xlu0 %v496, 127
        %v552 = vpop.permute.xlu0 %551
        %v561 = vsel %vm207, %v182, %v538
        %v562 = vsel %vm207, %v200, %v540
        %v563 = vsel %vm207, %v185, %v542
        %v564 = vsel %vm207, %v201, %v544
        %v565 = vsel %vm207, %v188, %v546
        %v566 = vsel %vm207, %v202, %v548
        %v567 = vsel %vm207, %v191, %v550
        %v568 = vsel %vm207, %v203, %v552
        %v569 = vmin.f32 %v175, %v321
        %v570 = vmin.f32 %v157, %v322
        %v571 = vmin.f32 %v176, %v323
        %v572 = vmin.f32 %v160, %v324
        %v573 = vmin.f32 %v177, %v325
        %v574 = vmin.f32 %v163, %v326
        %v575 = vmin.f32 %v178, %v327
        %v576 = vmin.f32 %v166, %v328
        %v577 = vmax.f32 %v175, %v321
        %v578 = vmax.f32 %v157, %v322
        %v579 = vmax.f32 %v176, %v323
        %v580 = vmax.f32 %v160, %v324
        %v581 = vmax.f32 %v177, %v325
        %v582 = vmax.f32 %v163, %v326
        %v583 = vmax.f32 %v178, %v327
        %v584 = vmax.f32 %v166, %v328
        %v585 = vmin.f32 %v138, %v441
        %v586 = vmin.f32 %v139, %v442
        %v587 = vmin.f32 %v140, %v443
        %v588 = vmin.f32 %v141, %v444
        %v589 = vmin.f32 %v142, %v445
        %v590 = vmin.f32 %v143, %v446
        %v591 = vmin.f32 %v144, %v447
        %v592 = vmin.f32 %v145, %v448
        %v593 = vmax.f32 %v138, %v441
        %v594 = vmax.f32 %v139, %v442
        %v595 = vmax.f32 %v140, %v443
        %v596 = vmax.f32 %v141, %v444
        %v597 = vmax.f32 %v142, %v445
        %v598 = vmax.f32 %v143, %v446
        %v599 = vmax.f32 %v144, %v447
        %v600 = vmax.f32 %v145, %v448
        %v601 = vmin.f32 %v182, %v561
        %v602 = vmin.f32 %v200, %v562
        %v603 = vmin.f32 %v185, %v563
        %v604 = vmin.f32 %v201, %v564
        %v605 = vmin.f32 %v188, %v565
        %v606 = vmin.f32 %v202, %v566
        %v607 = vmin.f32 %v191, %v567
        %v608 = vmin.f32 %v203, %v568
        %v609 = vmax.f32 %v182, %v561
        %v610 = vmax.f32 %v200, %v562
        %v611 = vmax.f32 %v185, %v563
        %v612 = vmax.f32 %v201, %v564
        %v613 = vmax.f32 %v188, %v565
        %v614 = vmax.f32 %v202, %v566
        %v615 = vmax.f32 %v191, %v567
        %v616 = vmax.f32 %v203, %v568
        %v617 = vmin.f32 %v289, %v569
        %v618 = vmin.f32 %v290, %v570
        %v619 = vmin.f32 %v291, %v571
        %v620 = vmin.f32 %v292, %v572
        %v621 = vmin.f32 %v293, %v573
        %v622 = vmin.f32 %v294, %v574
        %v623 = vmin.f32 %v295, %v575
        %v624 = vmin.f32 %v296, %v576
        %v625 = vmax.f32 %v289, %v569
        %v626 = vmax.f32 %v290, %v570
        %v627 = vmax.f32 %v291, %v571
        %v628 = vmax.f32 %v292, %v572
        %v629 = vmax.f32 %v293, %v573
        %v630 = vmax.f32 %v294, %v574
        %v631 = vmax.f32 %v295, %v575
        %v632 = vmax.f32 %v296, %v576
        %v633 = vmin.f32 %v409, %v585
        %v634 = vmin.f32 %v410, %v586
        %v635 = vmin.f32 %v411, %v587
        %v636 = vmin.f32 %v412, %v588
        %v637 = vmin.f32 %v413, %v589
        %v638 = vmin.f32 %v414, %v590
        %v639 = vmin.f32 %v415, %v591
        %v640 = vmin.f32 %v416, %v592
        %v641 = vmax.f32 %v409, %v585
        %v642 = vmax.f32 %v410, %v586
        %v643 = vmax.f32 %v411, %v587
        %v644 = vmax.f32 %v412, %v588
        %v645 = vmax.f32 %v413, %v589
        %v646 = vmax.f32 %v414, %v590
        %v647 = vmax.f32 %v415, %v591
        %v648 = vmax.f32 %v416, %v592
        %v649 = vmin.f32 %v529, %v601
        %v650 = vmin.f32 %v530, %v602
        %v651 = vmin.f32 %v531, %v603
        %v652 = vmin.f32 %v532, %v604
        %v653 = vmin.f32 %v533, %v605
        %v654 = vmin.f32 %v534, %v606
        %v655 = vmin.f32 %v535, %v607
        %v656 = vmin.f32 %v536, %v608
        %v657 = vmax.f32 %v529, %v601
        %v658 = vmax.f32 %v530, %v602
        %v659 = vmax.f32 %v531, %v603
        %v660 = vmax.f32 %v532, %v604
        %v661 = vmax.f32 %v533, %v605
        %v662 = vmax.f32 %v534, %v606
        %v663 = vmax.f32 %v535, %v607
        %v664 = vmax.f32 %v536, %v608
        %v665 = vmin.f32 %v625, %v577
        %v666 = vmin.f32 %v626, %v578
        %v667 = vmin.f32 %v627, %v579
        %v668 = vmin.f32 %v628, %v580
        %v669 = vmin.f32 %v629, %v581
        %v670 = vmin.f32 %v630, %v582
        %v671 = vmin.f32 %v631, %v583
        %v672 = vmin.f32 %v632, %v584
        %v673 = vmax.f32 %v625, %v577
        %v674 = vmax.f32 %v626, %v578
        %v675 = vmax.f32 %v627, %v579
        %v676 = vmax.f32 %v628, %v580
        %v677 = vmax.f32 %v629, %v581
        %v678 = vmax.f32 %v630, %v582
        %v679 = vmax.f32 %v631, %v583
        %v680 = vmax.f32 %v632, %v584
        %v681 = vmin.f32 %v641, %v593
        %v682 = vmin.f32 %v642, %v594
        %v683 = vmin.f32 %v643, %v595
        %v684 = vmin.f32 %v644, %v596
        %v685 = vmin.f32 %v645, %v597
        %v686 = vmin.f32 %v646, %v598
        %v687 = vmin.f32 %v647, %v599
        %v688 = vmin.f32 %v648, %v600
        %v689 = vmax.f32 %v641, %v593
        %v690 = vmax.f32 %v642, %v594
        %v691 = vmax.f32 %v643, %v595
        %v692 = vmax.f32 %v644, %v596
        %v693 = vmax.f32 %v645, %v597
        %v694 = vmax.f32 %v646, %v598
        %v695 = vmax.f32 %v647, %v599
        %v696 = vmax.f32 %v648, %v600
        %v697 = vmin.f32 %v657, %v609
        %v698 = vmin.f32 %v658, %v610
        %v699 = vmin.f32 %v659, %v611
        %v700 = vmin.f32 %v660, %v612
        %v701 = vmin.f32 %v661, %v613
        %v702 = vmin.f32 %v662, %v614
        %v703 = vmin.f32 %v663, %v615
        %v704 = vmin.f32 %v664, %v616
        %v705 = vmax.f32 %v657, %v609
        %v706 = vmax.f32 %v658, %v610
        %v707 = vmax.f32 %v659, %v611
        %v708 = vmax.f32 %v660, %v612
        %v709 = vmax.f32 %v661, %v613
        %v710 = vmax.f32 %v662, %v614
        %v711 = vmax.f32 %v663, %v615
        %v712 = vmax.f32 %v664, %v616
        %v713 = vmax.f32 %v617, %v633
        %v714 = vmax.f32 %v618, %v634
        %v715 = vmax.f32 %v619, %v635
        %v716 = vmax.f32 %v620, %v636
        %v717 = vmax.f32 %v621, %v637
        %v718 = vmax.f32 %v622, %v638
        %v719 = vmax.f32 %v623, %v639
        %v720 = vmax.f32 %v624, %v640
        %v721 = vmin.f32 %v689, %v705
        %v722 = vmin.f32 %v690, %v706
        %v723 = vmin.f32 %v691, %v707
        %v724 = vmin.f32 %v692, %v708
        %v725 = vmin.f32 %v693, %v709
        %v726 = vmin.f32 %v694, %v710
        %v727 = vmin.f32 %v695, %v711
        %v728 = vmin.f32 %v696, %v712
        %v729 = vmin.f32 %v681, %v697
        %v730 = vmin.f32 %v682, %v698
        %v731 = vmin.f32 %v683, %v699
        %v732 = vmin.f32 %v684, %v700
        %v733 = vmin.f32 %v685, %v701
        %v734 = vmin.f32 %v686, %v702
        %v735 = vmin.f32 %v687, %v703
        %v736 = vmin.f32 %v688, %v704
        %v737 = vmax.f32 %v681, %v697
        %v738 = vmax.f32 %v682, %v698
        %v739 = vmax.f32 %v683, %v699
        %v740 = vmax.f32 %v684, %v700
        %v741 = vmax.f32 %v685, %v701
        %v742 = vmax.f32 %v686, %v702
        %v743 = vmax.f32 %v687, %v703
        %v744 = vmax.f32 %v688, %v704
        %v745 = vmax.f32 %v713, %v649
        %v746 = vmax.f32 %v714, %v650
        %v747 = vmax.f32 %v715, %v651
        %v748 = vmax.f32 %v716, %v652
        %v749 = vmax.f32 %v717, %v653
        %v750 = vmax.f32 %v718, %v654
        %v751 = vmax.f32 %v719, %v655
        %v752 = vmax.f32 %v720, %v656
        %v753 = vmax.f32 %v665, %v729
        %v754 = vmax.f32 %v666, %v730
        %v755 = vmax.f32 %v667, %v731
        %v756 = vmax.f32 %v668, %v732
        %v757 = vmax.f32 %v669, %v733
        %v758 = vmax.f32 %v670, %v734
        %v759 = vmax.f32 %v671, %v735
        %v760 = vmax.f32 %v672, %v736
        %v761 = vmin.f32 %v673, %v721
        %v762 = vmin.f32 %v674, %v722
        %v763 = vmin.f32 %v675, %v723
        %v764 = vmin.f32 %v676, %v724
        %v765 = vmin.f32 %v677, %v725
        %v766 = vmin.f32 %v678, %v726
        %v767 = vmin.f32 %v679, %v727
        %v768 = vmin.f32 %v680, %v728
        %v769 = vmin.f32 %v753, %v737
        %v770 = vmin.f32 %v754, %v738
        %v771 = vmin.f32 %v755, %v739
        %v772 = vmin.f32 %v756, %v740
        %v773 = vmin.f32 %v757, %v741
        %v774 = vmin.f32 %v758, %v742
        %v775 = vmin.f32 %v759, %v743
        %v776 = vmin.f32 %v760, %v744
        %v777 = vmin.f32 %v769, %v761
        %v778 = vmin.f32 %v770, %v762
        %v779 = vmin.f32 %v771, %v763
        %v780 = vmin.f32 %v772, %v764
        %v781 = vmin.f32 %v773, %v765
        %v782 = vmin.f32 %v774, %v766
        %v783 = vmin.f32 %v775, %v767
        %v784 = vmin.f32 %v776, %v768
        %v785 = vmax.f32 %v769, %v761
        %v786 = vmax.f32 %v770, %v762
        %v787 = vmax.f32 %v771, %v763
        %v788 = vmax.f32 %v772, %v764
        %v789 = vmax.f32 %v773, %v765
        %v790 = vmax.f32 %v774, %v766
        %v791 = vmax.f32 %v775, %v767
        %v792 = vmax.f32 %v776, %v768
        %v793 = vmax.f32 %v745, %v777
        %v794 = vmax.f32 %v746, %v778
        %v795 = vmax.f32 %v747, %v779
        %v796 = vmax.f32 %v748, %v780
        %v797 = vmax.f32 %v749, %v781
        %v798 = vmax.f32 %v750, %v782
        %v799 = vmax.f32 %v751, %v783
        %v800 = vmax.f32 %v752, %v784
        %v801 = vmin.f32 %v793, %v785
        %v802 = vmin.f32 %v794, %v786
        %v803 = vmin.f32 %v795, %v787
        %v804 = vmin.f32 %v796, %v788
        %v805 = vmin.f32 %v797, %v789
        %v806 = vmin.f32 %v798, %v790
        %v807 = vmin.f32 %v799, %v791
        %v808 = vmin.f32 %v800, %v792
        %vm809 = vcmask 130048
        %810 = vst.msk [vmem:[%s135] sm:$0xff] %vm809, %v801
        %811 = vst.msk [vmem:[%s135 + $0x8] sm:$0xff] %vm809, %v802
        %812 = vst.msk [vmem:[%s135 + $0x10] sm:$0xff] %vm809, %v803
        %813 = vst.msk [vmem:[%s135 + $0x18] sm:$0xff] %vm809, %v804
        %814 = vst.msk [vmem:[%s135 + $0x20] sm:$0xff] %vm809, %v805
        %815 = vst.msk [vmem:[%s135 + $0x28] sm:$0xff] %vm809, %v806
        %816 = vst.msk [vmem:[%s135 + $0x30] sm:$0xff] %vm809, %v807
        %817 = vst.msk [vmem:[%s135 + $0x38] sm:$0xff] %vm809, %v808
        %s818 = sand.u32 %s52, 1
        %s819 = scalar_lea.sflag [#allocation4], %s818
        %s820 = sand.u32 %s52, 1
        %s821 = smul.addr %s820, 64
        %s822 = scalar_lea.vmem [#allocation5], %s821
        // Predicated region
        $region29: #{tpu_custom_call.1} parent=23 // pred_check
          %p823 = pneg %p62
        $region30: #{tpu_custom_call.1} parent=23 // pred_check_branch
          %825 = sbr.rel (%p823) target = $region32
        $region31: #{tpu_custom_call.1} parent=23 // pred_region
          %s826 = smul.u32 4, %s18
          %s828 = ssub.s32 1024, 1024
          %829 = vsyncadd %s819, %s828
          %s830 = smul.addr %s826, 2
          %s831 = smul.addr %s830, 128
          %s832 = scalar_lea.hbm %s1, %s831
          %s833 = sshll.u32 %s822, 4
          %s834 = int_to_ptr.vmem [resolvable:$true] %s833
          %839 = dma.vmem_to_hbm [thread:$0]  %s834, 1024, %s832, %s819, 128, 128, 8
        $region32: #{tpu_custom_call.1} parent=23 // pred_fallthru
          _
      $region24: #{tpu_custom_call.1} parent=5 // pred_fallthru
        _
      %p840 = scmp.le.s32.totalorder 2, %s13
      // Predicated region
      $region33: #{tpu_custom_call.1} parent=5 // pred_check
        %p841 = pneg %p840
      $region34: #{tpu_custom_call.1} parent=5 // pred_check_branch
        %843 = sbr.rel (%p841) target = $region36
      $region35: #{tpu_custom_call.1} parent=5 // pred_region
        %s844 = ssub.s32 %s13, 2
        // Predicated region
        $region37: #{tpu_custom_call.1} parent=35 // pred_check
          %p845 = pneg %p68
        $region38: #{tpu_custom_call.1} parent=35 // pred_check_branch
          %847 = sbr.rel (%p845) target = $region40
        $region39: #{tpu_custom_call.1} parent=35 // pred_region
          %s848 = sand.u32 %s53, 1
          %s849 = scalar_lea.sflag [#allocation4], %s848
          %s850 = sand.u32 %s53, 1
          %s851 = smul.addr %s850, 64
          %s852 = scalar_lea.vmem [#allocation5], %s851
          %853 = dma.done %s849, 1024
        $region40: #{tpu_custom_call.1} parent=35 // pred_fallthru
          _
      $region36: #{tpu_custom_call.1} parent=5 // pred_fallthru
        _
    $region6: #{tpu_custom_call.1} parent=1 // loop_footer
      %s17 = sadd.s32 1, %s13
    $region7: #{tpu_custom_call.1} parent=1 // loop_footer_branch
      %12 = sbr.rel target = $region3
    $region8: #{tpu_custom_call.1} parent=1 // loop_exit
      _
    %854 = vsyncpa [#allocation3], 1
    %s855 = scalar_lea.sflag [#allocation3], 1
    %856 = vsyncpa %s855, 1
    %857 = vsyncpa [#allocation4], 1
    %s858 = scalar_lea.sflag [#allocation4], 1
    %859 = vsyncpa %s858, 1

</llo_original>
